<compile_context>
chip_gen: v7x
topology: tpu7x:2x2x1
jax: 0.10.0
libtpu: 0.0.40
codegen_flags: <defaults>
</compile_context>

<pallas_src>
import jax
import jax.numpy as jnp
from jax.experimental import pallas as pl
from jax.experimental.pallas import tpu as pltpu

EPS = 1e-5


def _round_up(x, m):
    return (x + m - 1) // m * m


def _basic_block_kernel(x_ref, w_ref, b_ref, o_ref):
    """Fused Linear (+ folded eval-mode BN) + ReLU for one (TM, TN) output tile.

    x_ref: (TM, Kp) bf16, w_ref: (Kp, TN) bf16, b_ref: (1, TN) f32, o_ref: (TM, TN) f32.
    """
    z = jnp.dot(x_ref[...], w_ref[...], preferred_element_type=jnp.float32)
    z = z + b_ref[...]
    o_ref[...] = jnp.maximum(z, 0.0).astype(o_ref.dtype)


def prepare_params(w, b, bn_params=None):
    """Fold eval-mode BatchNorm1d into the Linear weights/bias and pad to lane-dense shapes.

    w: (in_features, out_features) f32 (torch weight transposed)
    b: (out_features,) f32
    bn_params: optional (gamma, beta, running_mean, running_var), each (out_features,)
    Returns (w_bf16 padded (Kp, Np), b_f32 padded (1, Np)).
    """
    w = w.astype(jnp.float32)
    b = b.astype(jnp.float32)
    if bn_params is not None:
        gamma, beta, rmean, rvar = (p.astype(jnp.float32) for p in bn_params)
        scale = gamma * jax.lax.rsqrt(rvar + EPS)          # per output channel
        w = w * scale[None, :]
        b = b * scale + (beta - rmean * scale)

    din, dout = w.shape
    kp = _round_up(din, 128)    # contracted dim: lane dim of x, sublane dim of W
    np_ = _round_up(dout, 128)  # output dim: lane-dense output tile
    if (kp, np_) != (din, dout):
        w = jnp.pad(w, ((0, kp - din), (0, np_ - dout)))
        b = jnp.pad(b, ((0, np_ - dout),))
    return w.astype(jnp.bfloat16), b.reshape(1, -1)


def basic_block_forward(x, w_folded, b_folded, *, tm=512, tn=512):
    """Runs the fused Pallas kernel.  x: (batch, in_features) f32.

    w_folded/b_folded come from prepare_params (feature dims already padded).
    Returns (batch, out_features_padded) f32; caller slices to the true out dim.
    """
    batch, din = x.shape
    kp, dout_p = w_folded.shape

    # --- pad x to the kernel's (batch, K) tile grid -------------------------------
    tm = min(tm, _round_up(batch, 8))        # batch tile, multiple of 8 (sublanes)
    padded_b = _round_up(batch, tm)
    tn = min(tn, dout_p)                     # output-feature tile, multiple of 128
    if padded_b != batch or kp != din:
        x = jnp.pad(x, ((0, padded_b - batch), (0, kp - din)))
    x = x.astype(jnp.bfloat16)               # single cast point; MXU runs bf16 operands

    grid = (padded_b // tm, dout_p // tn)
    cost = pl.CostEstimate(
        flops=2 * padded_b * kp * dout_p,
        transcendentals=0,
        bytes_accessed=(padded_b * kp * 2          # x (bf16)
                        + kp * dout_p * 2          # W (bf16)
                        + dout_p * 4               # b (f32)
                        + padded_b * dout_p * 4),  # out (f32)
    )

    out = pl.pallas_call(
        _basic_block_kernel,
        out_shape=jax.ShapeDtypeStruct((padded_b, dout_p), jnp.float32),
        grid=grid,
        in_specs=[
            pl.BlockSpec((tm, kp), lambda i, j: (i, 0)),    # x tile: resident over j
            pl.BlockSpec((kp, tn), lambda i, j: (0, j)),    # W tile: resident over i
            pl.BlockSpec((1, tn), lambda i, j: (0, j)),     # bias tile
        ],
        out_specs=pl.BlockSpec((tm, tn), lambda i, j: (i, j)),
        compiler_params=pltpu.CompilerParams(
            dimension_semantics=("parallel", "parallel"),   # megacore sharding
            vmem_limit_bytes=64 * 1024 * 1024,
        ),
        cost_estimate=cost,
    )(x, w_folded, b_folded)

    return out[:batch]


def reference_forward(x, w, b, bn_params=None):
    """Plain-JAX f32 reference of BasicBlock.forward (eval mode)."""
    h = x.astype(jnp.float32) @ w.astype(jnp.float32) + b.astype(jnp.float32)
    if bn_params is not None:
        g, be, rm, rv = bn_params
        h = (h - rm) / jnp.sqrt(rv + EPS) * g + be
    return jnp.maximum(h, 0.0)


if __name__ == "__main__":
    key = jax.random.PRNGKey(0)
    # Small, module-consistent shapes.  output_dim deliberately NOT a multiple of 128
    # to exercise the lane-padding path.
    batch, input_dim, output_dim = 16, 32, 64
    k_x, k_w, k_b, k_g, k_be, k_rm, k_rv = jax.random.split(key, 7)

    x = jax.random.normal(k_x, (batch, input_dim), jnp.float32)

    bound = 1.0 / (input_dim ** 0.5)  # PyTorch default Linear init range
    w = jax.random.uniform(k_w, (input_dim, output_dim), jnp.float32, -bound, bound)
    b = jax.random.uniform(k_b, (output_dim,), jnp.float32, -bound, bound)

    gamma = 1.0 + 0.1 * jax.random.normal(k_g, (output_dim,), jnp.float32)
    beta = 0.1 * jax.random.normal(k_be, (output_dim,), jnp.float32)
    rmean = 0.1 * jax.random.normal(k_rm, (output_dim,), jnp.float32)
    rvar = jnp.abs(1.0 + 0.1 * jax.random.normal(k_rv, (output_dim,), jnp.float32))

    # --- bn=True path: BN folded into the Linear at prep time ---
    w_f, b_f = prepare_params(w, b, (gamma, beta, rmean, rvar))
    y = jax.block_until_ready(basic_block_forward(x, w_f, b_f))[:, :output_dim]
    y_ref = reference_forward(x, w, b, (gamma, beta, rmean, rvar))
    assert y.shape == (batch, output_dim)
    assert jnp.allclose(y, y_ref, atol=2e-2, rtol=2e-2), (
        float(jnp.max(jnp.abs(y - y_ref))))

    # --- bn=False path (plain Linear -> ReLU, dropout is identity in eval) ---
    w_f0, b_f0 = prepare_params(w, b, None)
    y0 = jax.block_until_ready(basic_block_forward(x, w_f0, b_f0))[:, :output_dim]
    y0_ref = reference_forward(x, w, b, None)
    assert jnp.allclose(y0, y0_ref, atol=2e-2, rtol=2e-2), (
        float(jnp.max(jnp.abs(y0 - y0_ref))))

    print("KERNEL_OK")
</pallas_src>

<mosaic_0001>
module attributes {stable_mosaic.version = 11 : i64} {
  func.func @_basic_block_kernel(%arg0: i32, %arg1: i32, %arg2: memref<16x128xbf16, #tpu.memory_space<vmem>>, %arg3: memref<128x128xbf16, #tpu.memory_space<vmem>>, %arg4: memref<1x128xf32, #tpu.memory_space<vmem>>, %arg5: memref<16x128xf32, #tpu.memory_space<vmem>>) attributes {dimension_semantics = [#tpu.dimension_semantics<parallel>, #tpu.dimension_semantics<parallel>], iteration_bounds = array<i64: 1, 1>, scalar_prefetch = 0 : i64, scratch_operands = 0 : i64, tpu.core_type = #tpu.core_type<tc>, window_params = [{transform_indices = @transform_0, window_bounds = array<i64: 16, 128>}, {transform_indices = @transform_1, window_bounds = array<i64: 128, 128>}, {transform_indices = @transform_2, window_bounds = array<i64: 1, 128>}, {transform_indices = @transform_3, window_bounds = array<i64: 16, 128>}]} {
    %c0 = arith.constant 0 : index
    %c0_0 = arith.constant 0 : index
    %0 = vector.load %arg2[%c0, %c0_0] : memref<16x128xbf16, #tpu.memory_space<vmem>>, vector<16x128xbf16>
    %c0_1 = arith.constant 0 : index
    %c0_2 = arith.constant 0 : index
    %1 = vector.load %arg3[%c0_1, %c0_2] : memref<128x128xbf16, #tpu.memory_space<vmem>>, vector<128x128xbf16>
    %cst = arith.constant dense<0.000000e+00> : vector<16x128xf32>
    %2 = tpu.matmul %0, %1, %cst {dimension_numbers = #tpu.dot_dimension_numbers<[1], [0], [0], [1], [0, 0, 1, 1], [], []>} : vector<16x128xbf16>, vector<128x128xbf16>, vector<16x128xf32> -> vector<16x128xf32>
    %c0_3 = arith.constant 0 : index
    %c0_4 = arith.constant 0 : index
    %3 = vector.load %arg4[%c0_3, %c0_4] : memref<1x128xf32, #tpu.memory_space<vmem>>, vector<1x128xf32>
    %4 = vector.broadcast %3 : vector<1x128xf32> to vector<16x128xf32>
    %5 = arith.addf %2, %4 : vector<16x128xf32>
    %cst_5 = arith.constant 0.000000e+00 : f32
    %6 = vector.broadcast %cst_5 : f32 to vector<16x128xf32>
    %7 = arith.maximumf %5, %6 : vector<16x128xf32>
    %c0_6 = arith.constant 0 : index
    %c0_7 = arith.constant 0 : index
    %8 = vector.load %arg5[%c0_6, %c0_7] : memref<16x128xf32, #tpu.memory_space<vmem>>, vector<16x128xf32>
    tpu.vector_store %arg5[%c0_6, %c0_7], %7 {strides = array<i32>} : memref<16x128xf32, #tpu.memory_space<vmem>>, vector<16x128xf32>,
    return
  }
  func.func @transform_0(%arg0: i32, %arg1: i32) -> (i32, i32) {
    %c0_i32 = arith.constant 0 : i32
    %c0_i32_0 = arith.constant 0 : i32
    return %arg0, %c0_i32 : i32, i32
  }
  func.func @transform_1(%arg0: i32, %arg1: i32) -> (i32, i32) {
    %c0_i32 = arith.constant 0 : i32
    %c0_i32_0 = arith.constant 0 : i32
    return %c0_i32, %arg1 : i32, i32
  }
  func.func @transform_2(%arg0: i32, %arg1: i32) -> (i32, i32) {
    %c0_i32 = arith.constant 0 : i32
    %c0_i32_0 = arith.constant 0 : i32
    return %c0_i32, %arg1 : i32, i32
  }
  func.func @transform_3(%arg0: i32, %arg1: i32) -> (i32, i32) {
    %c0_i32 = arith.constant 0 : i32
    return %arg0, %arg1 : i32, i32
  }
}

</mosaic_0001>

<llo_original>
// kernel: tpu_custom_call.1
$region0: #{tpu_custom_call.1}
  #allocation0 [shape = 'u32[]', space=smem, size = 0x4, offset = 0x4, fixed_abs, tag = 'smem constant byte address 0x4 - core index']
  #allocation1 [shape = 'u32[144,128]{1,0:T(1,128)}', space=vmem, size = 0x12000, scoped, tag = 'internal scratch']
  %s0 = inlined_call_operand.hbm [shape: bf16[16,128], index: 0, kind: input, shape index: {}]
  %s1 = inlined_call_operand.hbm [shape: bf16[128,128], index: 1, kind: input, shape index: {}]
  %s2 = inlined_call_operand.hbm [shape: f32[1,128], index: 2, kind: input, shape index: {}]
  %s3 = inlined_call_operand.hbm [shape: f32[16,128], index: 3, kind: output, shape index: {}]
  %s4 = sld [smem:[#allocation0]]
  $region34: #{tpu_custom_call.1} parent=0
    _
  %s6 = ssub.s32 1, %s4
  %s7 = scalar_select 0, %s6, %s4
  $region1: #{tpu_custom_call.1} parent=0
    #allocation2 [shape = 'u8[4096]{0}', space=vmem, size = 0x1000, scoped, tag = 'input window, operand 0, single buffered']
    #allocation3 [shape = 's32[1]{0}', space=sflag, size = 0x4, scoped, tag = 'scoped memory for tpu_custom_call.1']
    #allocation4 [shape = 's32[1]{0}', space=sflag, size = 0x4, scoped, tag = 'scoped memory for tpu_custom_call.1']
    #allocation5 [shape = 'u8[32768]{0}', space=vmem, size = 0x8000, scoped, tag = 'input window, operand 1, single buffered']
    #allocation6 [shape = 's32[1]{0}', space=sflag, size = 0x4, scoped, tag = 'scoped memory for tpu_custom_call.1']
    #allocation7 [shape = 'u8[512]{0}', space=vmem, size = 0x400, scoped, tag = 'input window, operand 2, single buffered']
    #allocation8 [shape = 'u8[8192]{0}', space=vmem, size = 0x2000, scoped, tag = 'output window, operand 0, single buffered']
    %8 = vsyncpa [#allocation3], 0
    %9 = vsyncpa [#allocation6], 0
    %10 = vsyncpa [#allocation4], 0
    // Predicated region
    $region2: #{tpu_custom_call.1} parent=1 // pred_check
      _
    $region3: #{tpu_custom_call.1} parent=1 // pred_check_branch
      %12 = sbr.rel (0) target = $region5
    $region4: #{tpu_custom_call.1} parent=1 // pred_region
      %s14 = ssub.s32 128, 128
      %15 = vsyncadd [#allocation3], %s14
      %s16 = sshll.u32 [#allocation2], 4
      %s17 = int_to_ptr.vmem [resolvable:$true] %s16
      %22 = dma.hbm_to_vmem [thread:$0]  %s0, 128, %s17, [#allocation3], 64, 64, 4
    $region5: #{tpu_custom_call.1} parent=1 // pred_fallthru
      _
    // Predicated region
    $region6: #{tpu_custom_call.1} parent=1 // pred_check
      _
    $region7: #{tpu_custom_call.1} parent=1 // pred_check_branch
      %24 = sbr.rel (0) target = $region9
    $region8: #{tpu_custom_call.1} parent=1 // pred_region
      %s26 = ssub.s32 1024, 1024
      %27 = vsyncadd [#allocation6], %s26
      %s28 = sshll.u32 [#allocation5], 4
      %s29 = int_to_ptr.vmem [resolvable:$true] %s28
      %34 = dma.hbm_to_vmem [thread:$0]  %s1, 1024, %s29, [#allocation6], 64, 64, 4
    $region9: #{tpu_custom_call.1} parent=1 // pred_fallthru
      _
    // Predicated region
    $region10: #{tpu_custom_call.1} parent=1 // pred_check
      _
    $region11: #{tpu_custom_call.1} parent=1 // pred_check_branch
      %36 = sbr.rel (0) target = $region13
    $region12: #{tpu_custom_call.1} parent=1 // pred_region
      %s38 = ssub.s32 16, 16
      %39 = vsyncadd [#allocation6], %s38
      %s41 = sshll.u32 [#allocation7], 4
      %s42 = int_to_ptr.vmem [resolvable:$true] %s41
      %44 = dma.hbm_to_vmem [thread:$0]  %s2, 16, %s42, [#allocation6]
    $region13: #{tpu_custom_call.1} parent=1 // pred_fallthru
      _
    // Predicated region
    $region14: #{tpu_custom_call.1} parent=1 // pred_check
      _
    $region15: #{tpu_custom_call.1} parent=1 // pred_check_branch
      %46 = sbr.rel (0) target = $region17
    $region16: #{tpu_custom_call.1} parent=1 // pred_region
      %47 = dma.done [#allocation3], 128
    $region17: #{tpu_custom_call.1} parent=1 // pred_fallthru
      _
    // Predicated region
    $region18: #{tpu_custom_call.1} parent=1 // pred_check
      _
    $region19: #{tpu_custom_call.1} parent=1 // pred_check_branch
      %49 = sbr.rel (0) target = $region21
    $region20: #{tpu_custom_call.1} parent=1 // pred_region
      %50 = dma.done [#allocation6], 1024
    $region21: #{tpu_custom_call.1} parent=1 // pred_fallthru
      _
    // Predicated region
    $region22: #{tpu_custom_call.1} parent=1 // pred_check
      _
    $region23: #{tpu_custom_call.1} parent=1 // pred_check_branch
      %52 = sbr.rel (0) target = $region25
    $region24: #{tpu_custom_call.1} parent=1 // pred_region
      %53 = dma.done [#allocation6], 16
    $region25: #{tpu_custom_call.1} parent=1 // pred_fallthru
      _
    %v55 = vld [vmem:[#allocation2] sm:$0xf]
    %v56 = vld [vmem:[#allocation2 + $0x4] sm:$0xf]
    %v57 = vld [vmem:[#allocation5] sm:$0xf]
    %v58 = vld [vmem:[#allocation5 + $0x4] sm:$0xf]
    %v59 = vld [vmem:[#allocation5 + $0x8] sm:$0xf]
    %v60 = vld [vmem:[#allocation5 + $0xc] sm:$0xf]
    %v61 = vld [vmem:[#allocation5 + $0x10] sm:$0xf]
    %v62 = vld [vmem:[#allocation5 + $0x14] sm:$0xf]
    %v63 = vld [vmem:[#allocation5 + $0x18] sm:$0xf]
    %v64 = vld [vmem:[#allocation5 + $0x1c] sm:$0xf]
    %v65 = vld [vmem:[#allocation5 + $0x20] sm:$0xf]
    %v66 = vld [vmem:[#allocation5 + $0x24] sm:$0xf]
    %v67 = vld [vmem:[#allocation5 + $0x28] sm:$0xf]
    %v68 = vld [vmem:[#allocation5 + $0x2c] sm:$0xf]
    %v69 = vld [vmem:[#allocation5 + $0x30] sm:$0xf]
    %v70 = vld [vmem:[#allocation5 + $0x34] sm:$0xf]
    %v71 = vld [vmem:[#allocation5 + $0x38] sm:$0xf]
    %v72 = vld [vmem:[#allocation5 + $0x3c] sm:$0xf]
    %v73 = vld [vmem:[#allocation7] sm:$0x1]
    %v75 = vlaneseq
    %v76 = vshrl.u32 %v75, 7
    %v77 = vsub.s32 0, %v76
    %v78 = vrot.slane %v73, %v77
    %v82 = vunpack.c.l.b16 %v55
    %v83 = vunpack.c.l.b16 %v56
    %v84 = vpack.c.b16 %v83, %v82
    %v102 = vunpack.c.l.b16 %v57
    %v103 = vunpack.c.l.b16 %v58
    %v104 = vunpack.c.l.b16 %v59
    %v105 = vunpack.c.l.b16 %v60
    %v106 = vunpack.c.l.b16 %v61
    %v107 = vunpack.c.l.b16 %v62
    %v108 = vunpack.c.l.b16 %v63
    %v109 = vunpack.c.l.b16 %v64
    %v110 = vunpack.c.l.b16 %v65
    %v111 = vunpack.c.l.b16 %v66
    %v112 = vunpack.c.l.b16 %v67
    %v113 = vunpack.c.l.b16 %v68
    %v114 = vunpack.c.l.b16 %v69
    %v115 = vunpack.c.l.b16 %v70
    %v116 = vunpack.c.l.b16 %v71
    %v117 = vunpack.c.l.b16 %v72
    %v118 = vpack.c.b16 %v103, %v102
    %v119 = vpack.c.b16 %v105, %v104
    %v120 = vpack.c.b16 %v107, %v106
    %v121 = vpack.c.b16 %v109, %v108
    %v122 = vpack.c.b16 %v111, %v110
    %v123 = vpack.c.b16 %v113, %v112
    %v124 = vpack.c.b16 %v115, %v114
    %v125 = vpack.c.b16 %v117, %v116
    %134 = vmatprep.subr.bf16.mxu0 0
    %135 = vmatpush1.bf16.msra.mxu0 %v118
    %136 = vmatprep.subr.bf16.mxu0 0
    %137 = vmatpush1.bf16.msra.mxu0 %v119
    %138 = vmatprep.subr.bf16.mxu0 0
    %139 = vmatpush1.bf16.msra.mxu0 %v120
    %140 = vmatprep.subr.bf16.mxu0 0
    %141 = vmatpush1.bf16.msra.mxu0 %v121
    %142 = vmatprep.subr.bf16.mxu0 0
    %143 = vmatpush1.bf16.msra.mxu0 %v122
    %144 = vmatprep.subr.bf16.mxu0 0
    %145 = vmatpush1.bf16.msra.mxu0 %v123
    %146 = vmatprep.subr.bf16.mxu0 0
    %147 = vmatpush1.bf16.msra.mxu0 %v124
    %148 = vmatprep.subr.bf16.mxu0 0
    %149 = vmatpush1.bf16.msra.mxu0 %v125
    %150 = vmatprep.subr.bf16.mxu0 0
    %151 = vmatpush1.bf16.msra.mxu0 0
    %152 = vmatprep.subr.bf16.mxu0 0
    %153 = vmatpush1.bf16.msra.mxu0 0
    %154 = vmatprep.subr.bf16.mxu0 0
    %155 = vmatpush1.bf16.msra.mxu0 0
    %156 = vmatprep.subr.bf16.mxu0 0
    %157 = vmatpush1.bf16.msra.mxu0 0
    %158 = vmatprep.subr.bf16.mxu0 0
    %159 = vmatpush1.bf16.msra.mxu0 0
    %160 = vmatprep.subr.bf16.mxu0 0
    %161 = vmatpush1.bf16.msra.mxu0 0
    %162 = vmatprep.subr.bf16.mxu0 0
    %163 = vmatpush1.bf16.msra.mxu0 0
    %164 = vmatprep.subr.bf16.mxu0 0
    %165 = vmatpush1.bf16.msra.mxu0 0
    %166 = vmatprep.mubr.bf16.mxu0 0
    %167 = vmatmul.mubr.bf16.gmra.mrb[0].mxu0 %v84
    %v168 = vpop.f32.mrb[0].mxu0
    %v169 = vadd.f32 %v78, %v168
    %v170 = vpop.f32.mrb[0].mxu0
    %v171 = vpop.f32.mrb[0].mxu0
    %v172 = vadd.f32 %v78, %v171
    %v173 = vpop.f32.mrb[0].mxu0
    %174 = vdwg.mxu0
    %v175 = vmax.f32 %v169, 0.0
    %v176 = vmax.f32 %v172, 0.0
    %177 = vst [vmem:[#allocation8] sm:$0xff] %v175
    %178 = vst [vmem:[#allocation8 + $0x8] sm:$0xff] %v176
    // Predicated region
    $region26: #{tpu_custom_call.1} parent=1 // pred_check
      _
    $region27: #{tpu_custom_call.1} parent=1 // pred_check_branch
      %180 = sbr.rel (0) target = $region29
    $region28: #{tpu_custom_call.1} parent=1 // pred_region
      %s182 = ssub.s32 256, 256
      %183 = vsyncadd [#allocation4], %s182
      %s184 = sshll.u32 [#allocation8], 4
      %s185 = int_to_ptr.vmem [resolvable:$true] %s184
      %190 = dma.vmem_to_hbm [thread:$0]  %s185, 256, %s3, [#allocation4], 128, 128, 8
    $region29: #{tpu_custom_call.1} parent=1 // pred_fallthru
      _
    // Predicated region
    $region30: #{tpu_custom_call.1} parent=1 // pred_check
      _
    $region31: #{tpu_custom_call.1} parent=1 // pred_check_branch
      %192 = sbr.rel (0) target = $region33
    $region32: #{tpu_custom_call.1} parent=1 // pred_region
      %193 = dma.done [#allocation4], 256
    $region33: #{tpu_custom_call.1} parent=1 // pred_fallthru
      _
    %194 = vsyncpa [#allocation3], 1
    %195 = vsyncpa [#allocation6], 1
    %196 = vsyncpa [#allocation4], 1

</llo_original>
